<compile_context>
chip_gen: v7x
topology: tpu7x:2x2x1
jax: 0.10.0
libtpu: 0.0.40
codegen_flags: <defaults>
</compile_context>

<pallas_src>
import jax
import jax.numpy as jnp
from jax.experimental import pallas as pl
from jax.experimental.pallas import tpu as pltpu

_LANE = 128
_VMEM_BUDGET = 28 * 1024 * 1024          # planning budget (fits v7x 64 MiB physical VMEM)
_WEIGHT_TILE_BUDGET = 16 * 1024 * 1024   # per-buffer*2 budget for the streamed weight tile


def _round_up(a: int, m: int) -> int:
    return ((a + m - 1) // m) * m


def _largest_aligned_divisor(total: int, cap: int, align: int = _LANE) -> int:
    """Largest d <= cap with d % align == 0 and total % d == 0 (total is a multiple of align)."""
    best = align
    d = align
    while d <= min(total, cap):
        if total % d == 0:
            best = d
        d += align
    return best


# ----------------------------------------------------------------------------------
# Kernels
# ----------------------------------------------------------------------------------
def _linear_kernel_full_k(x_ref, w_ref, b_ref, o_ref):
    # x_ref: (tile_b, H)   w_ref: (H, tile_c)   -> one MXU contraction, no k loop.
    acc = jnp.dot(x_ref[...], w_ref[...], preferred_element_type=jnp.float32)
    o_ref[...] = (acc + b_ref[...].astype(jnp.float32)).astype(o_ref.dtype)


def _linear_kernel_tiled_k(x_ref, w_ref, b_ref, o_ref, acc_ref):
    # Grid = (class_tiles, batch_tiles, k_tiles); K is the reduction axis (last).
    k = pl.program_id(2)

    @pl.when(k == 0)
    def _():
        acc_ref[...] = jnp.zeros_like(acc_ref)

    acc_ref[...] += jnp.dot(x_ref[...], w_ref[...], preferred_element_type=jnp.float32)

    @pl.when(k == pl.num_programs(2) - 1)
    def _():
        o_ref[...] = (acc_ref[...] + b_ref[...].astype(jnp.float32)).astype(o_ref.dtype)


# ----------------------------------------------------------------------------------
# One-time parameter preparation (init-time: transpose + pad, NOT per forward call)
# ----------------------------------------------------------------------------------
def prepare_classifier_params(weight, bias):
    """weight: [C, H] (PyTorch nn.Linear layout); bias: [C].

    Returns (w_t, b_row): w_t [H_pad, C_pad] transposed + zero-padded to 128-multiples,
    b_row [1, C_pad]. Do this once at parameter-init time.
    """
    C, H = weight.shape
    H_pad = _round_up(H, _LANE)
    C_pad = _round_up(C, _LANE)
    w_t = jnp.pad(weight, ((0, C_pad - C), (0, H_pad - H))).T    # [H_pad, C_pad]
    w_t = jnp.asarray(w_t)                                       # materialize once
    b_row = jnp.pad(bias, (0, C_pad - C)).reshape(1, C_pad)
    return w_t, b_row


# ----------------------------------------------------------------------------------
# Forward
# ----------------------------------------------------------------------------------
def classifier_forward(x, w_t, b_row, num_classes, *, tile_b=None, tile_c=None, tile_k=None):
    """logits = x @ W^T + b, with W pre-transposed/padded by prepare_classifier_params.

    x: [B, H]; w_t: [H_pad, C_pad]; b_row: [1, C_pad]. Returns [B, num_classes] in x.dtype.
    """
    B, H = x.shape
    H_w, C_w = w_t.shape
    dtype = x.dtype
    itemsize = jnp.dtype(dtype).itemsize
    out_itemsize = itemsize
    sub = max(8, 32 // itemsize)          # sublane pack: 8 (f32) / 16 (bf16) / 32 (int8, fp8)

    # ---- tile sizes -------------------------------------------------------------
    if tile_c is None:
        tile_c = _largest_aligned_divisor(C_w, 1024)
    if tile_k is None:
        if H_w * tile_c * itemsize * 2 <= _WEIGHT_TILE_BUDGET:
            tile_k = H_w                  # full-K: drop the reduction grid axis entirely
        else:
            cap_k = max(_LANE, (_WEIGHT_TILE_BUDGET // (tile_c * itemsize * 2)) // _LANE * _LANE)
            tile_k = _largest_aligned_divisor(H_w, cap_k)

    # Extra param padding only if explicit tile overrides do not divide the padded dims.
    C_pad = _round_up(C_w, tile_c)
    H_pad = _round_up(H_w, tile_k)
    if C_pad != C_w or H_pad != H_w:
        w_t = jnp.pad(w_t, ((0, H_pad - H_w), (0, C_pad - C_w)))
        b_row = jnp.pad(b_row, ((0, 0), (0, C_pad - C_w)))

    tiled_k = tile_k < H_pad
    weight_bytes = tile_k * tile_c * itemsize * 2
    if tile_b is None:
        # Maximize the batch tile: the weight is then streamed from HBM exactly once.
        per_row = (tile_k * itemsize * 2 + tile_c * out_itemsize * 2
                   + (4 * tile_c if tiled_k else 0))
        cap_b = max(sub, ((_VMEM_BUDGET - weight_bytes) // per_row) // sub * sub)
        tile_b = min(_round_up(B, sub), cap_b, 4096)
    tile_b = max(sub, _round_up(tile_b, sub))

    B_pad = _round_up(B, tile_b)

    # ---- pad activations only when needed (zero K-pad keeps the contraction exact) ----
    if B_pad != B or H_pad != H:
        x = jnp.pad(x, ((0, B_pad - B), (0, H_pad - H)))

    n_c, n_b, n_k = C_pad // tile_c, B_pad // tile_b, H_pad // tile_k

    est_vmem = (weight_bytes
                + tile_b * tile_k * itemsize * 2
                + tile_b * tile_c * out_itemsize * 2
                + tile_c * out_itemsize * 2
                + (tile_b * tile_c * 4 if tiled_k else 0))

    cost = pl.CostEstimate(
        flops=2 * B_pad * H_pad * C_pad,
        transcendentals=0,
        bytes_accessed=itemsize * (B_pad * H_pad + H_pad * C_pad + C_pad)
                       + out_itemsize * B_pad * C_pad,
    )
    compiler_params = pltpu.CompilerParams(
        dimension_semantics=(("parallel", "parallel", "arbitrary") if tiled_k
                             else ("parallel", "parallel")),
        # Raise the scoped-VMEM limit only when needed (covers v5e's 16 MiB default;
        # still well under v7x's 64 MiB physical VMEM).
        vmem_limit_bytes=(48 * 1024 * 1024 if est_vmem > 12 * 1024 * 1024 else None),
    )

    if not tiled_k:
        # 2-D grid: class tiles leading so multi-TC chips shard over the class axis.
        grid_spec = pltpu.PrefetchScalarGridSpec(
            num_scalar_prefetch=0,
            grid=(n_c, n_b),
            in_specs=[
                pl.BlockSpec((tile_b, tile_k), lambda c, b: (b, 0)),   # x tile
                pl.BlockSpec((tile_k, tile_c), lambda c, b: (0, c)),   # weight tile [H, C]
                pl.BlockSpec((1, tile_c), lambda c, b: (0, c)),        # bias tile
            ],
            out_specs=pl.BlockSpec((tile_b, tile_c), lambda c, b: (b, c)),
        )
        kernel = _linear_kernel_full_k
    else:
        # Fallback for very large hidden dims: reduction (K) axis last, f32 accumulator.
        grid_spec = pltpu.PrefetchScalarGridSpec(
            num_scalar_prefetch=0,
            grid=(n_c, n_b, n_k),
            in_specs=[
                pl.BlockSpec((tile_b, tile_k), lambda c, b, k: (b, k)),
                pl.BlockSpec((tile_k, tile_c), lambda c, b, k: (k, c)),
                pl.BlockSpec((1, tile_c), lambda c, b, k: (0, c)),
            ],
            out_specs=pl.BlockSpec((tile_b, tile_c), lambda c, b, k: (b, c)),
            scratch_shapes=[pltpu.VMEM((tile_b, tile_c), jnp.float32)],
        )
        kernel = _linear_kernel_tiled_k

    out = pl.pallas_call(
        kernel,
        out_shape=jax.ShapeDtypeStruct((B_pad, C_pad), dtype),
        grid_spec=grid_spec,
        compiler_params=compiler_params,
        cost_estimate=cost,
    )(x, w_t, b_row)

    if B_pad != B or C_pad != num_classes:
        out = out[:B, :num_classes]
    return out


if __name__ == "__main__":
    # Small shapes consistent with Classifier(hidden_dim=32, num_classes=16).
    hidden_dim, num_classes, batch = 32, 16, 8

    key = jax.random.PRNGKey(0)
    kx, kw, kb = jax.random.split(key, 3)
    x = jax.random.normal(kx, (batch, hidden_dim), dtype=jnp.float32)
    weight = jax.random.normal(kw, (num_classes, hidden_dim), dtype=jnp.float32) * 0.1
    bias = jax.random.normal(kb, (num_classes,), dtype=jnp.float32) * 0.1

    w_t, b_row = prepare_classifier_params(weight, bias)   # one-time init-style prep
    logits = jax.block_until_ready(classifier_forward(x, w_t, b_row, num_classes))

    ref = x @ weight.T + bias                              # torch F.linear semantics
    assert logits.shape == (batch, num_classes)
    assert jnp.allclose(logits, ref, atol=1e-5, rtol=1e-5)

    # Exercise the multi-tile paths: default (full-K, single weight pass) and the
    # tiled-K fallback kernel (>1 program on every grid axis).
    B2, H2, C2 = 256, 384, 640
    k2x, k2w, k2b = jax.random.split(jax.random.PRNGKey(1), 3)
    x2 = jax.random.normal(k2x, (B2, H2), dtype=jnp.float32)
    w2 = jax.random.normal(k2w, (C2, H2), dtype=jnp.float32) * 0.05
    b2 = jax.random.normal(k2b, (C2,), dtype=jnp.float32) * 0.05
    w2_t, b2_row = prepare_classifier_params(w2, b2)

    out_full = classifier_forward(x2, w2_t, b2_row, C2)                     # 2-D grid, full K
    out_tiled = classifier_forward(x2, w2_t, b2_row, C2,
                                   tile_b=128, tile_c=128, tile_k=128)      # 3-D grid fallback
    jax.block_until_ready((out_full, out_tiled))

    ref2 = x2 @ w2.T + b2
    assert jnp.allclose(out_full, ref2, atol=1e-3, rtol=1e-3)
    assert jnp.allclose(out_tiled, ref2, atol=1e-3, rtol=1e-3)

    print("KERNEL_OK")
</pallas_src>

<mosaic_0001>
module attributes {stable_mosaic.version = 11 : i64} {
  func.func @_linear_kernel_full_k(%arg0: i32, %arg1: i32, %arg2: memref<8x128xf32, #tpu.memory_space<vmem>>, %arg3: memref<128x128xf32, #tpu.memory_space<vmem>>, %arg4: memref<1x128xf32, #tpu.memory_space<vmem>>, %arg5: memref<8x128xf32, #tpu.memory_space<vmem>>) attributes {dimension_semantics = [#tpu.dimension_semantics<parallel>, #tpu.dimension_semantics<parallel>], iteration_bounds = array<i64: 1, 1>, scalar_prefetch = 0 : i64, scratch_operands = 0 : i64, tpu.core_type = #tpu.core_type<tc>, window_params = [{transform_indices = @transform_0, window_bounds = array<i64: 8, 128>}, {transform_indices = @transform_1, window_bounds = array<i64: 128, 128>}, {transform_indices = @transform_2, window_bounds = array<i64: 1, 128>}, {transform_indices = @transform_3, window_bounds = array<i64: 8, 128>}]} {
    %c0 = arith.constant 0 : index
    %c0_0 = arith.constant 0 : index
    %0 = vector.load %arg2[%c0, %c0_0] : memref<8x128xf32, #tpu.memory_space<vmem>>, vector<8x128xf32>
    %c0_1 = arith.constant 0 : index
    %c0_2 = arith.constant 0 : index
    %1 = vector.load %arg3[%c0_1, %c0_2] : memref<128x128xf32, #tpu.memory_space<vmem>>, vector<128x128xf32>
    %cst = arith.constant dense<0.000000e+00> : vector<8x128xf32>
    %2 = tpu.matmul %0, %1, %cst {dimension_numbers = #tpu.dot_dimension_numbers<[1], [0], [0], [1], [0, 0, 1, 1], [], []>} : vector<8x128xf32>, vector<128x128xf32>, vector<8x128xf32> -> vector<8x128xf32>
    %c0_3 = arith.constant 0 : index
    %c0_4 = arith.constant 0 : index
    %3 = vector.load %arg4[%c0_3, %c0_4] : memref<1x128xf32, #tpu.memory_space<vmem>>, vector<1x128xf32>
    %4 = vector.broadcast %3 : vector<1x128xf32> to vector<8x128xf32>
    %5 = arith.addf %2, %4 : vector<8x128xf32>
    %c0_5 = arith.constant 0 : index
    %c0_6 = arith.constant 0 : index
    %6 = vector.load %arg5[%c0_5, %c0_6] : memref<8x128xf32, #tpu.memory_space<vmem>>, vector<8x128xf32>
    tpu.vector_store %arg5[%c0_5, %c0_6], %5 {strides = array<i32>} : memref<8x128xf32, #tpu.memory_space<vmem>>, vector<8x128xf32>,
    return
  }
  func.func @transform_0(%arg0: i32, %arg1: i32) -> (i32, i32) {
    %c0_i32 = arith.constant 0 : i32
    %c0_i32_0 = arith.constant 0 : i32
    return %arg1, %c0_i32 : i32, i32
  }
  func.func @transform_1(%arg0: i32, %arg1: i32) -> (i32, i32) {
    %c0_i32 = arith.constant 0 : i32
    %c0_i32_0 = arith.constant 0 : i32
    return %c0_i32, %arg0 : i32, i32
  }
  func.func @transform_2(%arg0: i32, %arg1: i32) -> (i32, i32) {
    %c0_i32 = arith.constant 0 : i32
    %c0_i32_0 = arith.constant 0 : i32
    return %c0_i32, %arg0 : i32, i32
  }
  func.func @transform_3(%arg0: i32, %arg1: i32) -> (i32, i32) {
    %c0_i32 = arith.constant 0 : i32
    return %arg1, %arg0 : i32, i32
  }
}

</mosaic_0001>

<llo_original>
// kernel: tpu_custom_call.1
$region0: #{tpu_custom_call.1}
  #allocation0 [shape = 'u32[]', space=smem, size = 0x4, offset = 0x4, fixed_abs, tag = 'smem constant byte address 0x4 - core index']
  #allocation1 [shape = 'u32[144,128]{1,0:T(1,128)}', space=vmem, size = 0x12000, scoped, tag = 'internal scratch']
  %s0 = inlined_call_operand.hbm [shape: f32[8,128], index: 0, kind: input, shape index: {}]
  %s1 = inlined_call_operand.hbm [shape: f32[128,128], index: 1, kind: input, shape index: {}]
  %s2 = inlined_call_operand.vmem [shape: f32[1,128], index: 2, kind: input, shape index: {}]
  %s3 = inlined_call_operand.hbm [shape: f32[8,128], index: 3, kind: output, shape index: {}]
  %s4 = sld [smem:[#allocation0]]
  $region30: #{tpu_custom_call.1} parent=0
    _
  %s6 = ssub.s32 1, %s4
  %s7 = scalar_select 0, %s6, %s4
  $region1: #{tpu_custom_call.1} parent=0
    #allocation2 [shape = 'u8[4096]{0}', space=vmem, size = 0x1000, scoped, tag = 'input window, operand 0, single buffered']
    #allocation3 [shape = 's32[1]{0}', space=sflag, size = 0x4, scoped, tag = 'scoped memory for tpu_custom_call.1']
    #allocation4 [shape = 's32[1]{0}', space=sflag, size = 0x4, scoped, tag = 'scoped memory for tpu_custom_call.1']
    #allocation5 [shape = 'u8[65536]{0}', space=vmem, size = 0x10000, scoped, tag = 'input window, operand 1, single buffered']
    #allocation6 [shape = 's32[1]{0}', space=sflag, size = 0x4, scoped, tag = 'scoped memory for tpu_custom_call.1']
    #allocation7 [shape = 'u8[4096]{0}', space=vmem, size = 0x1000, scoped, tag = 'output window, operand 0, single buffered']
    %8 = vsyncpa [#allocation3], 0
    %9 = vsyncpa [#allocation6], 0
    %10 = vsyncpa [#allocation4], 0
    // Predicated region
    $region2: #{tpu_custom_call.1} parent=1 // pred_check
      _
    $region3: #{tpu_custom_call.1} parent=1 // pred_check_branch
      %12 = sbr.rel (0) target = $region5
    $region4: #{tpu_custom_call.1} parent=1 // pred_region
      %s14 = ssub.s32 128, 128
      %15 = vsyncadd [#allocation3], %s14
      %s17 = sshll.u32 [#allocation2], 4
      %s18 = int_to_ptr.vmem [resolvable:$true] %s17
      %20 = dma.hbm_to_vmem [thread:$0]  %s0, 128, %s18, [#allocation3]
    $region5: #{tpu_custom_call.1} parent=1 // pred_fallthru
      _
    // Predicated region
    $region6: #{tpu_custom_call.1} parent=1 // pred_check
      _
    $region7: #{tpu_custom_call.1} parent=1 // pred_check_branch
      %22 = sbr.rel (0) target = $region9
    $region8: #{tpu_custom_call.1} parent=1 // pred_region
      %s24 = ssub.s32 2048, 2048
      %25 = vsyncadd [#allocation6], %s24
      %s26 = sshll.u32 [#allocation5], 4
      %s27 = int_to_ptr.vmem [resolvable:$true] %s26
      %32 = dma.hbm_to_vmem [thread:$0]  %s1, 2048, %s27, [#allocation6], 128, 128, 8
    $region9: #{tpu_custom_call.1} parent=1 // pred_fallthru
      _
    // Predicated region
    $region10: #{tpu_custom_call.1} parent=1 // pred_check
      _
    $region11: #{tpu_custom_call.1} parent=1 // pred_check_branch
      %34 = sbr.rel (0) target = $region13
    $region12: #{tpu_custom_call.1} parent=1 // pred_region
      _
    $region13: #{tpu_custom_call.1} parent=1 // pred_fallthru
      _
    // Predicated region
    $region14: #{tpu_custom_call.1} parent=1 // pred_check
      _
    $region15: #{tpu_custom_call.1} parent=1 // pred_check_branch
      %36 = sbr.rel (0) target = $region17
    $region16: #{tpu_custom_call.1} parent=1 // pred_region
      %37 = dma.done [#allocation3], 128
    $region17: #{tpu_custom_call.1} parent=1 // pred_fallthru
      _
    // Predicated region
    $region18: #{tpu_custom_call.1} parent=1 // pred_check
      _
    $region19: #{tpu_custom_call.1} parent=1 // pred_check_branch
      %39 = sbr.rel (0) target = $region21
    $region20: #{tpu_custom_call.1} parent=1 // pred_region
      %40 = dma.done [#allocation6], 2048
    $region21: #{tpu_custom_call.1} parent=1 // pred_fallthru
      _
    %v41 = vld [vmem:[#allocation2] sm:$0xff]
    %v42 = vld [vmem:[#allocation5] sm:$0xff]
    %v43 = vld [vmem:[#allocation5 + $0x8] sm:$0xff]
    %v44 = vld [vmem:[#allocation5 + $0x10] sm:$0xff]
    %v45 = vld [vmem:[#allocation5 + $0x18] sm:$0xff]
    %v46 = vld [vmem:[#allocation5 + $0x20] sm:$0xff]
    %v47 = vld [vmem:[#allocation5 + $0x28] sm:$0xff]
    %v48 = vld [vmem:[#allocation5 + $0x30] sm:$0xff]
    %v49 = vld [vmem:[#allocation5 + $0x38] sm:$0xff]
    %v50 = vld [vmem:[#allocation5 + $0x40] sm:$0xff]
    %v51 = vld [vmem:[#allocation5 + $0x48] sm:$0xff]
    %v52 = vld [vmem:[#allocation5 + $0x50] sm:$0xff]
    %v53 = vld [vmem:[#allocation5 + $0x58] sm:$0xff]
    %v54 = vld [vmem:[#allocation5 + $0x60] sm:$0xff]
    %v55 = vld [vmem:[#allocation5 + $0x68] sm:$0xff]
    %v56 = vld [vmem:[#allocation5 + $0x70] sm:$0xff]
    %v57 = vld [vmem:[#allocation5 + $0x78] sm:$0xff]
    %v58 = vld [vmem:[%s2] sm:$0x1]
    %v60 = vlaneseq
    %v61 = vshrl.u32 %v60, 7
    %v62 = vsub.s32 0, %v61
    %v63 = vrot.slane %v58, %v62
    %65 = vmatprep.subr.mxu0 0.0
    %66 = vmatpush1.msra.mxu0 %v42
    %67 = vmatprep.subr.mxu0 0.0
    %68 = vmatpush1.msra.mxu0 %v43
    %69 = vmatprep.subr.mxu0 0.0
    %70 = vmatpush1.msra.mxu0 %v44
    %71 = vmatprep.subr.mxu0 0.0
    %72 = vmatpush1.msra.mxu0 %v45
    %73 = vmatprep.subr.mxu0 0.0
    %74 = vmatpush1.msra.mxu0 %v46
    %75 = vmatprep.subr.mxu0 0.0
    %76 = vmatpush1.msra.mxu0 %v47
    %77 = vmatprep.subr.mxu0 0.0
    %78 = vmatpush1.msra.mxu0 %v48
    %79 = vmatprep.subr.mxu0 0.0
    %80 = vmatpush1.msra.mxu0 %v49
    %81 = vmatprep.subr.mxu0 0.0
    %82 = vmatpush1.msra.mxu0 %v50
    %83 = vmatprep.subr.mxu0 0.0
    %84 = vmatpush1.msra.mxu0 %v51
    %85 = vmatprep.subr.mxu0 0.0
    %86 = vmatpush1.msra.mxu0 %v52
    %87 = vmatprep.subr.mxu0 0.0
    %88 = vmatpush1.msra.mxu0 %v53
    %89 = vmatprep.subr.mxu0 0.0
    %90 = vmatpush1.msra.mxu0 %v54
    %91 = vmatprep.subr.mxu0 0.0
    %92 = vmatpush1.msra.mxu0 %v55
    %93 = vmatprep.subr.mxu0 0.0
    %94 = vmatpush1.msra.mxu0 %v56
    %95 = vmatprep.subr.mxu0 0.0
    %96 = vmatpush1.msra.mxu0 %v57
    %97 = vmatprep.subr.mxu0 0.0
    %98 = vmatpush1.msra.mxu0 0.0
    %99 = vmatprep.subr.mxu0 0.0
    %100 = vmatpush1.msra.mxu0 0.0
    %101 = vmatprep.subr.mxu0 0.0
    %102 = vmatpush1.msra.mxu0 0.0
    %103 = vmatprep.subr.mxu0 0.0
    %104 = vmatpush1.msra.mxu0 0.0
    %105 = vmatprep.subr.mxu0 0.0
    %106 = vmatpush1.msra.mxu0 0.0
    %107 = vmatprep.subr.mxu0 0.0
    %108 = vmatpush1.msra.mxu0 0.0
    %109 = vmatprep.subr.mxu0 0.0
    %110 = vmatpush1.msra.mxu0 0.0
    %111 = vmatprep.subr.mxu0 0.0
    %112 = vmatpush1.msra.mxu0 0.0
    %113 = vmatprep.subr.mxu0 0.0
    %114 = vmatpush1.msra.mxu0 0.0
    %115 = vmatprep.subr.mxu0 0.0
    %116 = vmatpush1.msra.mxu0 0.0
    %117 = vmatprep.subr.mxu0 0.0
    %118 = vmatpush1.msra.mxu0 0.0
    %119 = vmatprep.subr.mxu0 0.0
    %120 = vmatpush1.msra.mxu0 0.0
    %121 = vmatprep.subr.mxu0 0.0
    %122 = vmatpush1.msra.mxu0 0.0
    %123 = vmatprep.subr.mxu0 0.0
    %124 = vmatpush1.msra.mxu0 0.0
    %125 = vmatprep.subr.mxu0 0.0
    %126 = vmatpush1.msra.mxu0 0.0
    %127 = vmatprep.subr.mxu0 0.0
    %128 = vmatpush1.msra.mxu0 0.0
    %129 = vmatprep.mubr.f32.mxu0 0.0
    %130 = vmatmul.mubr.f32.gmra.mrb[0].mxu0 %v41
    %v131 = vpop.f32.mrb[0].mxu0
    %v132 = vadd.f32 %v63, %v131
    %v133 = vpop.f32.mrb[0].mxu0
    %134 = vdwg.mxu0
    %135 = vst [vmem:[#allocation7] sm:$0xff] %v132
    // Predicated region
    $region22: #{tpu_custom_call.1} parent=1 // pred_check
      _
    $region23: #{tpu_custom_call.1} parent=1 // pred_check_branch
      %137 = sbr.rel (0) target = $region25
    $region24: #{tpu_custom_call.1} parent=1 // pred_region
      %s139 = ssub.s32 128, 128
      %140 = vsyncadd [#allocation4], %s139
      %s142 = sshll.u32 [#allocation7], 4
      %s143 = int_to_ptr.vmem [resolvable:$true] %s142
      %145 = dma.vmem_to_hbm [thread:$0]  %s143, 128, %s3, [#allocation4]
    $region25: #{tpu_custom_call.1} parent=1 // pred_fallthru
      _
    // Predicated region
    $region26: #{tpu_custom_call.1} parent=1 // pred_check
      _
    $region27: #{tpu_custom_call.1} parent=1 // pred_check_branch
      %147 = sbr.rel (0) target = $region29
    $region28: #{tpu_custom_call.1} parent=1 // pred_region
      %148 = dma.done [#allocation4], 128
    $region29: #{tpu_custom_call.1} parent=1 // pred_fallthru
      _
    %149 = vsyncpa [#allocation3], 1
    %150 = vsyncpa [#allocation6], 1
    %151 = vsyncpa [#allocation4], 1

</llo_original>
